<compile_context>
chip_gen: v5e
topology: v5e:2x2
jax: 0.10.0
libtpu: 0.0.40
codegen_flags: <defaults>
</compile_context>

<pallas_src>
import jax
import jax.numpy as jnp
from jax.experimental import pallas as pl
from jax.experimental.pallas import tpu as pltpu


def _round_up(x, m):
    return (x + m - 1) // m * m


def dqn_mlp_kernel(x_ref, w1_ref, b1_ref, w2_ref, b2_ref, w3_ref, b3_ref, o_ref):
    """Fused 3-layer MLP: Linear -> ReLU -> Linear -> ReLU -> Linear (all f32)."""
    x = x_ref[...]                                                       # (tb, obs)
    h1 = jnp.dot(x, w1_ref[...], preferred_element_type=jnp.float32) + b1_ref[...]
    h1 = jnp.maximum(h1, 0.0)
    h2 = jnp.dot(h1, w2_ref[...], preferred_element_type=jnp.float32) + b2_ref[...]
    h2 = jnp.maximum(h2, 0.0)
    q = jnp.dot(h2, w3_ref[...], preferred_element_type=jnp.float32) + b3_ref[...]
    o_ref[...] = q.astype(o_ref.dtype)                                   # (tb, n_actions)


def prepare_params(w1, b1, w2, b2, w3, b3):
    """One-time parameter prep (call ONCE, reuse across forward calls).

    Ensures f32 weights of shape (in_features, out_features) and (1, out)
    bias rows for in-kernel broadcast.  Keeping this out of dqn_forward avoids
    re-casting constant parameters on every step.
    """
    f32 = jnp.float32
    return (jnp.asarray(w1, f32), jnp.asarray(b1, f32).reshape(1, -1),
            jnp.asarray(w2, f32), jnp.asarray(b2, f32).reshape(1, -1),
            jnp.asarray(w3, f32), jnp.asarray(b3, f32).reshape(1, -1))


def _batch_tile(B, max_batch_tile):
    if B <= 8:
        return B                      # block dim == full array dim: legal for any size
    tb = min(max_batch_tile, _round_up(B, 8))   # multiple of 8 sublanes (f32)
    # v7x megacore: ensure >= 2 grid steps when there is enough work so both
    # TensorCores get a batch shard.  No effect on v5e/v6e (single TC).
    if pl.cdiv(B, tb) < 2 and B >= 512:
        tb = _round_up(pl.cdiv(B, 2), 8)
    return tb


def dqn_forward(x, params, *, max_batch_tile=1024):
    """x: (B, obs_size) f32 -> (B, n_actions) f32."""
    w1, b1, w2, b2, w3, b3 = params
    B, obs = x.shape
    hidden = w1.shape[1]
    n_actions = w3.shape[1]

    tb = _batch_tile(B, max_batch_tile)
    grid = (pl.cdiv(B, tb),)          # partial last block (if any) is masked on store

    return pl.pallas_call(
        dqn_mlp_kernel,
        out_shape=jax.ShapeDtypeStruct((B, n_actions), jnp.float32),
        grid=grid,
        in_specs=[
            # x streams per batch tile; weights/biases stay VMEM-resident.
            pl.BlockSpec((tb, obs), lambda i: (i, 0)),
            pl.BlockSpec((obs, hidden), lambda i: (0, 0)),
            pl.BlockSpec((1, hidden), lambda i: (0, 0)),
            pl.BlockSpec((hidden, hidden), lambda i: (0, 0)),
            pl.BlockSpec((1, hidden), lambda i: (0, 0)),
            pl.BlockSpec((hidden, n_actions), lambda i: (0, 0)),
            pl.BlockSpec((1, n_actions), lambda i: (0, 0)),
        ],
        out_specs=pl.BlockSpec((tb, n_actions), lambda i: (i, 0)),
        compiler_params=pltpu.CompilerParams(
            dimension_semantics=("parallel",)),   # megacore split on v7x
    )(x, w1, b1, w2, b2, w3, b3)


def init_params(key, obs_size, n_actions, hidden=128):
    """Deterministic synthetic init (PyTorch-like uniform fan-in scaling)."""
    def linear_init(k, fan_in, fan_out):
        kw, kb = jax.random.split(k)
        bound = 1.0 / jnp.sqrt(fan_in)
        w = jax.random.uniform(kw, (fan_in, fan_out), jnp.float32, -bound, bound)
        b = jax.random.uniform(kb, (fan_out,), jnp.float32, -bound, bound)
        return w, b

    k1, k2, k3 = jax.random.split(key, 3)
    w1, b1 = linear_init(k1, obs_size, hidden)
    w2, b2 = linear_init(k2, hidden, hidden)
    w3, b3 = linear_init(k3, hidden, n_actions)
    return prepare_params(w1, b1, w2, b2, w3, b3)


if __name__ == "__main__":
    # LunarLander-v2: obs_size=8, n_actions=4; small batch for the demo.
    obs_size, n_actions, batch = 8, 4, 2

    key = jax.random.PRNGKey(0)
    k_params, k_x = jax.random.split(key)
    params = init_params(k_params, obs_size, n_actions)
    x = jax.random.normal(k_x, (batch, obs_size), dtype=jnp.float32)

    q = jax.block_until_ready(dqn_forward(x, params))

    # Pure-JAX f32 reference (same math as the PyTorch module's forward).
    w1, b1, w2, b2, w3, b3 = params
    ref = jnp.maximum(x @ w1 + b1, 0.0)
    ref = jnp.maximum(ref @ w2 + b2, 0.0)
    ref = ref @ w3 + b3

    assert q.shape == (batch, n_actions)
    assert jnp.allclose(q, ref, atol=1e-4, rtol=1e-4)

    print("KERNEL_OK")
</pallas_src>

<mosaic_0001>
module attributes {stable_mosaic.version = 11 : i64} {
  func.func @dqn_mlp_kernel(%arg0: i32, %arg1: memref<2x8xf32, #tpu.memory_space<vmem>>, %arg2: memref<8x128xf32, #tpu.memory_space<vmem>>, %arg3: memref<1x128xf32, #tpu.memory_space<vmem>>, %arg4: memref<128x128xf32, #tpu.memory_space<vmem>>, %arg5: memref<1x128xf32, #tpu.memory_space<vmem>>, %arg6: memref<128x4xf32, #tpu.memory_space<vmem>>, %arg7: memref<1x4xf32, #tpu.memory_space<vmem>>, %arg8: memref<2x4xf32, #tpu.memory_space<vmem>>) attributes {dimension_semantics = [#tpu.dimension_semantics<parallel>], iteration_bounds = array<i64: 1>, scalar_prefetch = 0 : i64, scratch_operands = 0 : i64, tpu.core_type = #tpu.core_type<tc>, window_params = [{transform_indices = @transform_0, window_bounds = array<i64: 2, 8>}, {pipeline_mode = #tpu.pipeline_mode<synchronous>, transform_indices = @transform_1, window_bounds = array<i64: 8, 128>}, {pipeline_mode = #tpu.pipeline_mode<synchronous>, transform_indices = @transform_2, window_bounds = array<i64: 1, 128>}, {pipeline_mode = #tpu.pipeline_mode<synchronous>, transform_indices = @transform_3, window_bounds = array<i64: 128, 128>}, {pipeline_mode = #tpu.pipeline_mode<synchronous>, transform_indices = @transform_4, window_bounds = array<i64: 1, 128>}, {pipeline_mode = #tpu.pipeline_mode<synchronous>, transform_indices = @transform_5, window_bounds = array<i64: 128, 4>}, {pipeline_mode = #tpu.pipeline_mode<synchronous>, transform_indices = @transform_6, window_bounds = array<i64: 1, 4>}, {transform_indices = @transform_7, window_bounds = array<i64: 2, 4>}]} {
    %c0 = arith.constant 0 : index
    %c0_0 = arith.constant 0 : index
    %0 = vector.load %arg1[%c0, %c0_0] : memref<2x8xf32, #tpu.memory_space<vmem>>, vector<2x8xf32>
    %c0_1 = arith.constant 0 : index
    %c0_2 = arith.constant 0 : index
    %1 = vector.load %arg2[%c0_1, %c0_2] : memref<8x128xf32, #tpu.memory_space<vmem>>, vector<8x128xf32>
    %cst = arith.constant dense<0.000000e+00> : vector<2x128xf32>
    %2 = tpu.matmul %0, %1, %cst {dimension_numbers = #tpu.dot_dimension_numbers<[1], [0], [0], [1], [0, 0, 1, 1], [], []>} : vector<2x8xf32>, vector<8x128xf32>, vector<2x128xf32> -> vector<2x128xf32>
    %c0_3 = arith.constant 0 : index
    %c0_4 = arith.constant 0 : index
    %3 = vector.load %arg3[%c0_3, %c0_4] : memref<1x128xf32, #tpu.memory_space<vmem>>, vector<1x128xf32>
    %4 = vector.broadcast %3 : vector<1x128xf32> to vector<2x128xf32>
    %5 = arith.addf %2, %4 : vector<2x128xf32>
    %cst_5 = arith.constant 0.000000e+00 : f32
    %6 = vector.broadcast %cst_5 : f32 to vector<2x128xf32>
    %7 = arith.maximumf %5, %6 : vector<2x128xf32>
    %c0_6 = arith.constant 0 : index
    %c0_7 = arith.constant 0 : index
    %8 = vector.load %arg4[%c0_6, %c0_7] : memref<128x128xf32, #tpu.memory_space<vmem>>, vector<128x128xf32>
    %cst_8 = arith.constant dense<0.000000e+00> : vector<2x128xf32>
    %9 = tpu.matmul %7, %8, %cst_8 {dimension_numbers = #tpu.dot_dimension_numbers<[1], [0], [0], [1], [0, 0, 1, 1], [], []>} : vector<2x128xf32>, vector<128x128xf32>, vector<2x128xf32> -> vector<2x128xf32>
    %c0_9 = arith.constant 0 : index
    %c0_10 = arith.constant 0 : index
    %10 = vector.load %arg5[%c0_9, %c0_10] : memref<1x128xf32, #tpu.memory_space<vmem>>, vector<1x128xf32>
    %11 = vector.broadcast %10 : vector<1x128xf32> to vector<2x128xf32>
    %12 = arith.addf %9, %11 : vector<2x128xf32>
    %cst_11 = arith.constant 0.000000e+00 : f32
    %13 = vector.broadcast %cst_11 : f32 to vector<2x128xf32>
    %14 = arith.maximumf %12, %13 : vector<2x128xf32>
    %c0_12 = arith.constant 0 : index
    %c0_13 = arith.constant 0 : index
    %15 = vector.load %arg6[%c0_12, %c0_13] : memref<128x4xf32, #tpu.memory_space<vmem>>, vector<128x4xf32>
    %cst_14 = arith.constant dense<0.000000e+00> : vector<2x4xf32>
    %16 = tpu.matmul %14, %15, %cst_14 {dimension_numbers = #tpu.dot_dimension_numbers<[1], [0], [0], [1], [0, 0, 1, 1], [], []>} : vector<2x128xf32>, vector<128x4xf32>, vector<2x4xf32> -> vector<2x4xf32>
    %c0_15 = arith.constant 0 : index
    %c0_16 = arith.constant 0 : index
    %17 = vector.load %arg7[%c0_15, %c0_16] : memref<1x4xf32, #tpu.memory_space<vmem>>, vector<1x4xf32>
    %18 = vector.broadcast %17 : vector<1x4xf32> to vector<2x4xf32>
    %19 = arith.addf %16, %18 : vector<2x4xf32>
    %c0_17 = arith.constant 0 : index
    %c0_18 = arith.constant 0 : index
    %20 = vector.load %arg8[%c0_17, %c0_18] : memref<2x4xf32, #tpu.memory_space<vmem>>, vector<2x4xf32>
    tpu.vector_store %arg8[%c0_17, %c0_18], %19 {strides = array<i32>} : memref<2x4xf32, #tpu.memory_space<vmem>>, vector<2x4xf32>,
    return
  }
  func.func @transform_0(%arg0: i32) -> (i32, i32) {
    %c0_i32 = arith.constant 0 : i32
    %c0_i32_0 = arith.constant 0 : i32
    return %arg0, %c0_i32 : i32, i32
  }
  func.func @transform_1(%arg0: i32) -> (i32, i32) {
    %c0_i32 = arith.constant 0 : i32
    %c0_i32_0 = arith.constant 0 : i32
    %c0_i32_1 = arith.constant 0 : i32
    return %c0_i32, %c0_i32_0 : i32, i32
  }
  func.func @transform_2(%arg0: i32) -> (i32, i32) {
    %c0_i32 = arith.constant 0 : i32
    %c0_i32_0 = arith.constant 0 : i32
    %c0_i32_1 = arith.constant 0 : i32
    return %c0_i32, %c0_i32_0 : i32, i32
  }
  func.func @transform_3(%arg0: i32) -> (i32, i32) {
    %c0_i32 = arith.constant 0 : i32
    %c0_i32_0 = arith.constant 0 : i32
    %c0_i32_1 = arith.constant 0 : i32
    return %c0_i32, %c0_i32_0 : i32, i32
  }
  func.func @transform_4(%arg0: i32) -> (i32, i32) {
    %c0_i32 = arith.constant 0 : i32
    %c0_i32_0 = arith.constant 0 : i32
    %c0_i32_1 = arith.constant 0 : i32
    return %c0_i32, %c0_i32_0 : i32, i32
  }
  func.func @transform_5(%arg0: i32) -> (i32, i32) {
    %c0_i32 = arith.constant 0 : i32
    %c0_i32_0 = arith.constant 0 : i32
    %c0_i32_1 = arith.constant 0 : i32
    return %c0_i32, %c0_i32_0 : i32, i32
  }
  func.func @transform_6(%arg0: i32) -> (i32, i32) {
    %c0_i32 = arith.constant 0 : i32
    %c0_i32_0 = arith.constant 0 : i32
    %c0_i32_1 = arith.constant 0 : i32
    return %c0_i32, %c0_i32_0 : i32, i32
  }
  func.func @transform_7(%arg0: i32) -> (i32, i32) {
    %c0_i32 = arith.constant 0 : i32
    %c0_i32_0 = arith.constant 0 : i32
    return %arg0, %c0_i32 : i32, i32
  }
}

</mosaic_0001>

<llo_original>
// kernel: tpu_custom_call.1
$region0: #{tpu_custom_call.1}
  #allocation0 [shape = 'u32[]', space=smem, size = 0x4, offset = 0x4, fixed_abs, tag = 'smem constant byte address 0x4 - core index']
  #allocation1 [shape = 'u32[72,128]{1,0:T(1,128)}', space=vmem, size = 0x9000, scoped, tag = 'internal scratch']
  %s0 = inlined_call_operand.vmem [shape: f32[2,8], index: 0, kind: input, shape index: {}]
  %s1 = inlined_call_operand.hbm [shape: f32[8,128], index: 1, kind: input, shape index: {}]
  %s2 = inlined_call_operand.vmem [shape: f32[1,128], index: 2, kind: input, shape index: {}]
  %s3 = inlined_call_operand.vmem [shape: f32[128,128], index: 3, kind: input, shape index: {}]
  %s4 = inlined_call_operand.vmem [shape: f32[1,128], index: 4, kind: input, shape index: {}]
  %s5 = inlined_call_operand.vmem [shape: f32[128,4], index: 5, kind: input, shape index: {}]
  %s6 = inlined_call_operand.vmem [shape: f32[1,4], index: 6, kind: input, shape index: {}]
  %s7 = inlined_call_operand.hbm [shape: f32[2,4], index: 7, kind: output, shape index: {}]
  %s8 = sld [smem:[#allocation0]]
  $region42: #{tpu_custom_call.1} parent=0
    _
  %s10 = ssub.s32 1, %s8
  %s11 = scalar_select 0, %s10, %s8
  $region1: #{tpu_custom_call.1} parent=0
    #allocation2 [shape = 'u8[4096]{0}', space=vmem, size = 0x1000, scoped, tag = 'input window, operand 1, single buffered']
    #allocation3 [shape = 's32[1]{0}', space=sflag, size = 0x4, scoped, tag = 'scoped memory for tpu_custom_call.1']
    #allocation4 [shape = 's32[1]{0}', space=sflag, size = 0x4, scoped, tag = 'scoped memory for tpu_custom_call.1']
    #allocation5 [shape = 'u8[1024]{0}', space=vmem, size = 0x400, scoped, tag = 'output window, operand 0, single buffered']
    %12 = vsyncpa [#allocation3], 0
    %13 = vsyncpa [#allocation4], 0
    // Predicated region
    $region2: #{tpu_custom_call.1} parent=1 // pred_check
      _
    $region3: #{tpu_custom_call.1} parent=1 // pred_check_branch
      %15 = sbr.rel (0) target = $region5
    $region4: #{tpu_custom_call.1} parent=1 // pred_region
      _
    $region5: #{tpu_custom_call.1} parent=1 // pred_fallthru
      _
    // Predicated region
    $region6: #{tpu_custom_call.1} parent=1 // pred_check
      _
    $region7: #{tpu_custom_call.1} parent=1 // pred_check_branch
      %17 = sbr.rel (0) target = $region9
    $region8: #{tpu_custom_call.1} parent=1 // pred_region
      %19 = vsyncadd [#allocation3], 0
      %s21 = sshll.u32 %s1, 4
      %s22 = int_to_ptr.hbm [resolvable:$true] %s21
      %s23 = sshll.u32 [#allocation2], 4
      %s24 = int_to_ptr.vmem [resolvable:$true] %s23
      %26 = dma.hbm_to_vmem [thread:$0]  %s22, 128, %s24, [#allocation3]
    $region9: #{tpu_custom_call.1} parent=1 // pred_fallthru
      _
    // Predicated region
    $region10: #{tpu_custom_call.1} parent=1 // pred_check
      _
    $region11: #{tpu_custom_call.1} parent=1 // pred_check_branch
      %28 = sbr.rel (0) target = $region13
    $region12: #{tpu_custom_call.1} parent=1 // pred_region
      _
    $region13: #{tpu_custom_call.1} parent=1 // pred_fallthru
      _
    // Predicated region
    $region14: #{tpu_custom_call.1} parent=1 // pred_check
      _
    $region15: #{tpu_custom_call.1} parent=1 // pred_check_branch
      %30 = sbr.rel (0) target = $region17
    $region16: #{tpu_custom_call.1} parent=1 // pred_region
      _
    $region17: #{tpu_custom_call.1} parent=1 // pred_fallthru
      _
    // Predicated region
    $region18: #{tpu_custom_call.1} parent=1 // pred_check
      _
    $region19: #{tpu_custom_call.1} parent=1 // pred_check_branch
      %32 = sbr.rel (0) target = $region21
    $region20: #{tpu_custom_call.1} parent=1 // pred_region
      _
    $region21: #{tpu_custom_call.1} parent=1 // pred_fallthru
      _
    // Predicated region
    $region22: #{tpu_custom_call.1} parent=1 // pred_check
      _
    $region23: #{tpu_custom_call.1} parent=1 // pred_check_branch
      %34 = sbr.rel (0) target = $region25
    $region24: #{tpu_custom_call.1} parent=1 // pred_region
      _
    $region25: #{tpu_custom_call.1} parent=1 // pred_fallthru
      _
    // Predicated region
    $region26: #{tpu_custom_call.1} parent=1 // pred_check
      _
    $region27: #{tpu_custom_call.1} parent=1 // pred_check_branch
      %36 = sbr.rel (0) target = $region29
    $region28: #{tpu_custom_call.1} parent=1 // pred_region
      _
    $region29: #{tpu_custom_call.1} parent=1 // pred_fallthru
      _
    // Predicated region
    $region30: #{tpu_custom_call.1} parent=1 // pred_check
      _
    $region31: #{tpu_custom_call.1} parent=1 // pred_check_branch
      %38 = sbr.rel (0) target = $region33
    $region32: #{tpu_custom_call.1} parent=1 // pred_region
      %40 = dma.done [#allocation3], 128
    $region33: #{tpu_custom_call.1} parent=1 // pred_fallthru
      _
    %v41 = vld [vmem:[%s0] sm:$0x3]
    %v42 = vld [vmem:[#allocation2] sm:$0xff]
    %v43 = vld [vmem:[%s2] sm:$0x1]
    %v45 = vperm.slane %v43, 0
    %vm47 = vcmask 64512
    %v49 = vsel %vm47, %v41, 0
    %51 = vmatpush.msra.mxu0 0.0
    %52 = vmatpush.msra.mxu0 0.0
    %53 = vmatpush.msra.mxu0 0.0
    %54 = vmatpush.msra.mxu0 0.0
    %55 = vmatpush.msra.mxu0 0.0
    %56 = vmatpush.msra.mxu0 0.0
    %57 = vmatpush.msra.mxu0 0.0
    %58 = vmatpush.msra.mxu0 0.0
    %59 = vmatpush.msra.mxu0 0.0
    %60 = vmatpush.msra.mxu0 0.0
    %61 = vmatpush.msra.mxu0 0.0
    %62 = vmatpush.msra.mxu0 0.0
    %63 = vmatpush.msra.mxu0 0.0
    %64 = vmatpush.msra.mxu0 0.0
    %65 = vmatpush.msra.mxu0 0.0
    %66 = vmatpush.msra.mxu0 %v42
    %67 = vmatmul.f32.gmra.mxu0 %v49
    %v68 = vpop.f32.mrf.mxu0
    %v69 = vadd.f32 %v45, %v68
    %70 = vdwg.mxu0
    %v71 = vmax.f32 %v69, 0.0
    %v72 = vld [vmem:[%s3] sm:$0xff]
    %v73 = vld [vmem:[%s3 + $0x8] sm:$0xff]
    %v74 = vld [vmem:[%s3 + $0x10] sm:$0xff]
    %v75 = vld [vmem:[%s3 + $0x18] sm:$0xff]
    %v76 = vld [vmem:[%s3 + $0x20] sm:$0xff]
    %v77 = vld [vmem:[%s3 + $0x28] sm:$0xff]
    %v78 = vld [vmem:[%s3 + $0x30] sm:$0xff]
    %v79 = vld [vmem:[%s3 + $0x38] sm:$0xff]
    %v80 = vld [vmem:[%s3 + $0x40] sm:$0xff]
    %v81 = vld [vmem:[%s3 + $0x48] sm:$0xff]
    %v82 = vld [vmem:[%s3 + $0x50] sm:$0xff]
    %v83 = vld [vmem:[%s3 + $0x58] sm:$0xff]
    %v84 = vld [vmem:[%s3 + $0x60] sm:$0xff]
    %v85 = vld [vmem:[%s3 + $0x68] sm:$0xff]
    %v86 = vld [vmem:[%s3 + $0x70] sm:$0xff]
    %v87 = vld [vmem:[%s3 + $0x78] sm:$0xff]
    %v88 = vld [vmem:[%s4] sm:$0x1]
    %v90 = vperm.slane %v88, 0
    %92 = vmatpush.msra.mxu0 %v87
    %93 = vmatpush.msra.mxu0 %v86
    %94 = vmatpush.msra.mxu0 %v85
    %95 = vmatpush.msra.mxu0 %v84
    %96 = vmatpush.msra.mxu0 %v83
    %97 = vmatpush.msra.mxu0 %v82
    %98 = vmatpush.msra.mxu0 %v81
    %99 = vmatpush.msra.mxu0 %v80
    %100 = vmatpush.msra.mxu0 %v79
    %101 = vmatpush.msra.mxu0 %v78
    %102 = vmatpush.msra.mxu0 %v77
    %103 = vmatpush.msra.mxu0 %v76
    %104 = vmatpush.msra.mxu0 %v75
    %105 = vmatpush.msra.mxu0 %v74
    %106 = vmatpush.msra.mxu0 %v73
    %107 = vmatpush.msra.mxu0 %v72
    %108 = vmatmul.f32.gmra.mxu0 %v71
    %v109 = vpop.f32.mrf.mxu0
    %v110 = vadd.f32 %v90, %v109
    %111 = vdwg.mxu0
    %v112 = vmax.f32 %v110, 0.0
    %v113 = vld [vmem:[%s5] sm:$0xff]
    %v114 = vld [vmem:[%s5 + $0x8] sm:$0xff]
    %v115 = vld [vmem:[%s5 + $0x10] sm:$0xff]
    %v116 = vld [vmem:[%s5 + $0x18] sm:$0xff]
    %v117 = vld [vmem:[%s5 + $0x20] sm:$0xff]
    %v118 = vld [vmem:[%s5 + $0x28] sm:$0xff]
    %v119 = vld [vmem:[%s5 + $0x30] sm:$0xff]
    %v120 = vld [vmem:[%s5 + $0x38] sm:$0xff]
    %v121 = vld [vmem:[%s5 + $0x40] sm:$0xff]
    %v122 = vld [vmem:[%s5 + $0x48] sm:$0xff]
    %v123 = vld [vmem:[%s5 + $0x50] sm:$0xff]
    %v124 = vld [vmem:[%s5 + $0x58] sm:$0xff]
    %v125 = vld [vmem:[%s5 + $0x60] sm:$0xff]
    %v126 = vld [vmem:[%s5 + $0x68] sm:$0xff]
    %v127 = vld [vmem:[%s5 + $0x70] sm:$0xff]
    %v128 = vld [vmem:[%s5 + $0x78] sm:$0xff]
    %v129 = vld [vmem:[%s6] sm:$0x1]
    %v131 = vperm.slane %v129, 0
    %133 = vmatpush.msra.mxu0 %v128
    %134 = vmatpush.msra.mxu0 %v127
    %135 = vmatpush.msra.mxu0 %v126
    %136 = vmatpush.msra.mxu0 %v125
    %137 = vmatpush.msra.mxu0 %v124
    %138 = vmatpush.msra.mxu0 %v123
    %139 = vmatpush.msra.mxu0 %v122
    %140 = vmatpush.msra.mxu0 %v121
    %141 = vmatpush.msra.mxu0 %v120
    %142 = vmatpush.msra.mxu0 %v119
    %143 = vmatpush.msra.mxu0 %v118
    %144 = vmatpush.msra.mxu0 %v117
    %145 = vmatpush.msra.mxu0 %v116
    %146 = vmatpush.msra.mxu0 %v115
    %147 = vmatpush.msra.mxu0 %v114
    %148 = vmatpush.msra.mxu0 %v113
    %149 = vmatmul.f32.gmra.mxu0 %v112
    %v150 = vpop.f32.mrf.mxu0
    %v151 = vadd.f32 %v131, %v150
    %152 = vdwg.mxu0
    %vm153 = vcmask 25600
    %154 = vst.msk [vmem:[#allocation5] sm:$0x3] %vm153, %v151
    // Predicated region
    $region34: #{tpu_custom_call.1} parent=1 // pred_check
      _
    $region35: #{tpu_custom_call.1} parent=1 // pred_check_branch
      %156 = sbr.rel (0) target = $region37
    $region36: #{tpu_custom_call.1} parent=1 // pred_region
      %158 = vsyncadd [#allocation4], 0
      %s160 = sshll.u32 [#allocation5], 4
      %s161 = int_to_ptr.vmem [resolvable:$true] %s160
      %s162 = sshll.u32 %s7, 4
      %s163 = int_to_ptr.hbm [resolvable:$true] %s162
      %165 = dma.vmem_to_hbm [thread:$0]  %s161, 32, %s163, [#allocation4]
    $region37: #{tpu_custom_call.1} parent=1 // pred_fallthru
      _
    // Predicated region
    $region38: #{tpu_custom_call.1} parent=1 // pred_check
      _
    $region39: #{tpu_custom_call.1} parent=1 // pred_check_branch
      %167 = sbr.rel (0) target = $region41
    $region40: #{tpu_custom_call.1} parent=1 // pred_region
      %169 = dma.done [#allocation4], 32
    $region41: #{tpu_custom_call.1} parent=1 // pred_fallthru
      _
    %170 = vsyncpa [#allocation3], 1
    %171 = vsyncpa [#allocation4], 1

</llo_original>
